<compile_context>
chip_gen: v5e
topology: v5e:2x2
jax: 0.10.0
libtpu: 0.0.40
codegen_flags: <defaults>
</compile_context>

<pallas_src>
import functools

import jax
import jax.numpy as jnp
from jax.experimental import pallas as pl
from jax.experimental.pallas import tpu as pltpu

_FEAT = 512        # backbone feature width (x_FER)
_FC_PAD = 128      # lane-dense padded width for the 7-class head


def _generate_model_kernel(x_ref, wproj_ref, bproj_ref, wfc_ref, bfc_ref,
                           logits_ref, feat_ref, *, C, HW, inv_hw):
    # x_ref:      [tb, C*HW] f32   batch tile; channels folded into the lane dim
    # wproj_ref:  [C, 512]   f32   stand-in backbone projection
    # bproj_ref:  [1, 512]   f32
    # wfc_ref:    [512, 128] f32   nn.Linear(512, 7) weight, zero-padded to 128 lanes
    # bfc_ref:    [1, 128]   f32   zero-padded bias
    # logits_ref: [tb, 128]  f32
    # feat_ref:   [tb, 512]  f32
    tb = x_ref.shape[0]

    # Global average pool per channel (lane-axis reduction on a static ref
    # slice, f32 accumulate) fused with the stand-in C->512 projection as C
    # VPU broadcast-FMAs — no whole-tile copy, no degenerate K=C MXU matmul.
    feat = jnp.broadcast_to(bproj_ref[...], (tb, _FEAT))               # [tb, 512]
    for c in range(C):                                                 # tiny static unroll
        chunk = x_ref[:, pl.ds(c * HW, HW)]                            # [tb, HW] f32
        pooled_c = jnp.sum(chunk, axis=-1, keepdims=True) * inv_hw     # [tb, 1]
        feat = feat + pooled_c * wproj_ref[c:c + 1, :]                 # [tb, 512]
    feat_ref[...] = feat

    # fc: Linear(512, 7), padded to 128 output lanes for unmasked vector stores.
    logits_ref[...] = (jnp.dot(feat, wfc_ref[...],
                               preferred_element_type=jnp.float32)
                       + bfc_ref[...])                                 # [tb, 128]


def _choose_tb(B, C, HW, *, buf_bytes=12 << 20, target_steps=4):
    """Batch-tile rows per grid step: fits a per-buffer VMEM byte budget and,
    when the batch is large enough, yields >= target_steps grid steps so the
    parallel batch axis pipelines / shards across v7x's two TensorCores."""
    if B <= 8:
        return B                                     # block dim == full array dim
    row_bytes = (C * HW + _FEAT + _FC_PAD) * 4       # f32 x row + feat + logits rows
    tb = min(B, max(8, (buf_bytes // row_bytes) // 8 * 8))
    if B >= 8 * target_steps:
        per_step = -(-B // target_steps)             # ceil(B / target_steps)
        tb = min(tb, max(8, -(-per_step // 8) * 8))  # rounded up to 8 sublanes
    return tb


def generate_model_forward(x, params):
    """x: [B, C, H, W] float32. Returns (logits [B, 7], x_FER [B, 512])."""
    B, C, H, W = x.shape
    HW = H * W
    tb = _choose_tb(B, C, HW)

    # Free, contiguous reshape: channels fold into the lane dimension.
    # No dtype cast, no pad — x is read from HBM once, in native f32.
    x2 = x.reshape(B, C * HW)

    w_proj = params["w_proj"].astype(jnp.float32)                       # [C, 512]
    b_proj = params["b_proj"].reshape(1, _FEAT).astype(jnp.float32)     # [1, 512]
    # Zero-pad the 7-wide head to a lane-dense 128 columns (sliced back below).
    w_fc = jnp.zeros((_FEAT, _FC_PAD), jnp.float32).at[:, :7].set(
        params["w_fc"].astype(jnp.float32))
    b_fc = jnp.zeros((1, _FC_PAD), jnp.float32).at[:, :7].set(
        params["b_fc"].reshape(1, 7).astype(jnp.float32))

    kernel = functools.partial(_generate_model_kernel, C=C, HW=HW,
                               inv_hw=1.0 / float(HW))

    logits_pad, feat = pl.pallas_call(
        kernel,
        out_shape=(
            jax.ShapeDtypeStruct((B, _FC_PAD), jnp.float32),
            jax.ShapeDtypeStruct((B, _FEAT), jnp.float32),
        ),
        grid=(pl.cdiv(B, tb),),
        in_specs=[
            pl.BlockSpec((tb, C * HW), lambda i: (i, 0)),   # x tile (double-buffered)
            pl.BlockSpec((C, _FEAT), lambda i: (0, 0)),     # weights stay resident
            pl.BlockSpec((1, _FEAT), lambda i: (0, 0)),
            pl.BlockSpec((_FEAT, _FC_PAD), lambda i: (0, 0)),
            pl.BlockSpec((1, _FC_PAD), lambda i: (0, 0)),
        ],
        out_specs=(
            pl.BlockSpec((tb, _FC_PAD), lambda i: (i, 0)),
            pl.BlockSpec((tb, _FEAT), lambda i: (i, 0)),
        ),
        compiler_params=pltpu.CompilerParams(
            dimension_semantics=("parallel",),
            # ~2 x 12 MiB double-buffered x tiles + outputs + tiny weights:
            # fits v7x's 64 MiB physical VMEM with headroom and raises the
            # v5e/v6e default scoped limit for bigger, roofline-friendly tiles.
            vmem_limit_bytes=40 << 20,
        ),
    )(x2, w_proj, b_proj, w_fc, b_fc)

    return logits_pad[:, :7], feat


def make_params(C, key):
    k1, k2, k3, k4 = jax.random.split(key, 4)
    return {
        "w_proj": jax.random.normal(k1, (C, _FEAT), jnp.float32) * 0.02,
        "b_proj": jax.random.normal(k2, (1, _FEAT), jnp.float32) * 0.02,
        "w_fc": jax.random.normal(k3, (_FEAT, 7), jnp.float32) * 0.02,
        "b_fc": jax.random.normal(k4, (1, 7), jnp.float32) * 0.02,
    }


if __name__ == "__main__":
    key = jax.random.PRNGKey(0)
    kx, kp = jax.random.split(key)

    B, C, H, W = 2, 4, 16, 16
    x = jax.random.normal(kx, (B, C, H, W), jnp.float32)
    params = make_params(C, kp)

    logits, x_FER = generate_model_forward(x, params)
    jax.block_until_ready((logits, x_FER))

    # Pure-JAX f32 reference of the same stand-in computation.
    pooled_ref = jnp.mean(x.reshape(B, C, H * W), axis=-1)              # [B, C]
    feat_ref = (jnp.dot(pooled_ref, params["w_proj"],
                        preferred_element_type=jnp.float32)
                + params["b_proj"])
    logits_ref = (jnp.dot(feat_ref, params["w_fc"],
                          preferred_element_type=jnp.float32)
                  + params["b_fc"])

    assert logits.shape == (B, 7) and x_FER.shape == (B, _FEAT)
    assert jnp.allclose(x_FER, feat_ref, atol=1e-3, rtol=1e-3), "feature mismatch"
    assert jnp.allclose(logits, logits_ref, atol=1e-3, rtol=1e-3), "logits mismatch"

    print("KERNEL_OK")
</pallas_src>

<mosaic_0001>
module attributes {stable_mosaic.version = 11 : i64} {
  func.func @_generate_model_kernel(%arg0: i32, %arg1: memref<2x1024xf32, #tpu.memory_space<vmem>>, %arg2: memref<4x512xf32, #tpu.memory_space<vmem>>, %arg3: memref<1x512xf32, #tpu.memory_space<vmem>>, %arg4: memref<512x128xf32, #tpu.memory_space<vmem>>, %arg5: memref<1x128xf32, #tpu.memory_space<vmem>>, %arg6: memref<2x128xf32, #tpu.memory_space<vmem>>, %arg7: memref<2x512xf32, #tpu.memory_space<vmem>>) attributes {dimension_semantics = [#tpu.dimension_semantics<parallel>], iteration_bounds = array<i64: 1>, scalar_prefetch = 0 : i64, scratch_operands = 0 : i64, tpu.core_type = #tpu.core_type<tc>, window_params = [{transform_indices = @transform_0, window_bounds = array<i64: 2, 1024>}, {pipeline_mode = #tpu.pipeline_mode<synchronous>, transform_indices = @transform_1, window_bounds = array<i64: 4, 512>}, {pipeline_mode = #tpu.pipeline_mode<synchronous>, transform_indices = @transform_2, window_bounds = array<i64: 1, 512>}, {pipeline_mode = #tpu.pipeline_mode<synchronous>, transform_indices = @transform_3, window_bounds = array<i64: 512, 128>}, {pipeline_mode = #tpu.pipeline_mode<synchronous>, transform_indices = @transform_4, window_bounds = array<i64: 1, 128>}, {transform_indices = @transform_5, window_bounds = array<i64: 2, 128>}, {transform_indices = @transform_6, window_bounds = array<i64: 2, 512>}]} {
    %c0 = arith.constant 0 : index
    %c0_0 = arith.constant 0 : index
    %0 = vector.load %arg3[%c0, %c0_0] : memref<1x512xf32, #tpu.memory_space<vmem>>, vector<1x512xf32>
    %1 = vector.shape_cast %0 : vector<1x512xf32> to vector<1x512xf32>
    %2 = vector.broadcast %1 : vector<1x512xf32> to vector<2x512xf32>
    %c0_1 = arith.constant 0 : index
    %c0_2 = arith.constant 0 : index
    %3 = vector.load %arg1[%c0_1, %c0_2] : memref<2x1024xf32, #tpu.memory_space<vmem>>, vector<2x256xf32>
    %cst = arith.constant dense<0.000000e+00> : vector<2xf32>
    %4 = vector.multi_reduction <add>, %3, %cst [1] : vector<2x256xf32> to vector<2xf32>
    %5 = vector.shape_cast %4 : vector<2xf32> to vector<2x1xf32>
    %cst_3 = arith.constant 3.906250e-03 : f32
    %6 = vector.broadcast %cst_3 : f32 to vector<2x1xf32>
    %7 = arith.mulf %5, %6 : vector<2x1xf32>
    %c0_4 = arith.constant 0 : index
    %c0_5 = arith.constant 0 : index
    %8 = vector.load %arg2[%c0_4, %c0_5] : memref<4x512xf32, #tpu.memory_space<vmem>>, vector<1x512xf32>
    %9 = vector.broadcast %7 : vector<2x1xf32> to vector<2x512xf32>
    %10 = vector.broadcast %8 : vector<1x512xf32> to vector<2x512xf32>
    %11 = arith.mulf %9, %10 : vector<2x512xf32>
    %12 = arith.addf %2, %11 : vector<2x512xf32>
    %c0_6 = arith.constant 0 : index
    %c256 = arith.constant 256 : index
    %13 = vector.load %arg1[%c0_6, %c256] : memref<2x1024xf32, #tpu.memory_space<vmem>>, vector<2x256xf32>
    %cst_7 = arith.constant dense<0.000000e+00> : vector<2xf32>
    %14 = vector.multi_reduction <add>, %13, %cst_7 [1] : vector<2x256xf32> to vector<2xf32>
    %15 = vector.shape_cast %14 : vector<2xf32> to vector<2x1xf32>
    %cst_8 = arith.constant 3.906250e-03 : f32
    %16 = vector.broadcast %cst_8 : f32 to vector<2x1xf32>
    %17 = arith.mulf %15, %16 : vector<2x1xf32>
    %c1 = arith.constant 1 : index
    %c0_9 = arith.constant 0 : index
    %18 = vector.load %arg2[%c1, %c0_9] : memref<4x512xf32, #tpu.memory_space<vmem>>, vector<1x512xf32>
    %19 = vector.broadcast %17 : vector<2x1xf32> to vector<2x512xf32>
    %20 = vector.broadcast %18 : vector<1x512xf32> to vector<2x512xf32>
    %21 = arith.mulf %19, %20 : vector<2x512xf32>
    %22 = arith.addf %12, %21 : vector<2x512xf32>
    %c0_10 = arith.constant 0 : index
    %c512 = arith.constant 512 : index
    %23 = vector.load %arg1[%c0_10, %c512] : memref<2x1024xf32, #tpu.memory_space<vmem>>, vector<2x256xf32>
    %cst_11 = arith.constant dense<0.000000e+00> : vector<2xf32>
    %24 = vector.multi_reduction <add>, %23, %cst_11 [1] : vector<2x256xf32> to vector<2xf32>
    %25 = vector.shape_cast %24 : vector<2xf32> to vector<2x1xf32>
    %cst_12 = arith.constant 3.906250e-03 : f32
    %26 = vector.broadcast %cst_12 : f32 to vector<2x1xf32>
    %27 = arith.mulf %25, %26 : vector<2x1xf32>
    %c2 = arith.constant 2 : index
    %c0_13 = arith.constant 0 : index
    %28 = vector.load %arg2[%c2, %c0_13] : memref<4x512xf32, #tpu.memory_space<vmem>>, vector<1x512xf32>
    %29 = vector.broadcast %27 : vector<2x1xf32> to vector<2x512xf32>
    %30 = vector.broadcast %28 : vector<1x512xf32> to vector<2x512xf32>
    %31 = arith.mulf %29, %30 : vector<2x512xf32>
    %32 = arith.addf %22, %31 : vector<2x512xf32>
    %c0_14 = arith.constant 0 : index
    %c768 = arith.constant 768 : index
    %33 = vector.load %arg1[%c0_14, %c768] : memref<2x1024xf32, #tpu.memory_space<vmem>>, vector<2x256xf32>
    %cst_15 = arith.constant dense<0.000000e+00> : vector<2xf32>
    %34 = vector.multi_reduction <add>, %33, %cst_15 [1] : vector<2x256xf32> to vector<2xf32>
    %35 = vector.shape_cast %34 : vector<2xf32> to vector<2x1xf32>
    %cst_16 = arith.constant 3.906250e-03 : f32
    %36 = vector.broadcast %cst_16 : f32 to vector<2x1xf32>
    %37 = arith.mulf %35, %36 : vector<2x1xf32>
    %c3 = arith.constant 3 : index
    %c0_17 = arith.constant 0 : index
    %38 = vector.load %arg2[%c3, %c0_17] : memref<4x512xf32, #tpu.memory_space<vmem>>, vector<1x512xf32>
    %39 = vector.broadcast %37 : vector<2x1xf32> to vector<2x512xf32>
    %40 = vector.broadcast %38 : vector<1x512xf32> to vector<2x512xf32>
    %41 = arith.mulf %39, %40 : vector<2x512xf32>
    %42 = arith.addf %32, %41 : vector<2x512xf32>
    %c0_18 = arith.constant 0 : index
    %c0_19 = arith.constant 0 : index
    %43 = vector.load %arg7[%c0_18, %c0_19] : memref<2x512xf32, #tpu.memory_space<vmem>>, vector<2x512xf32>
    tpu.vector_store %arg7[%c0_18, %c0_19], %42 {strides = array<i32>} : memref<2x512xf32, #tpu.memory_space<vmem>>, vector<2x512xf32>,
    %c0_20 = arith.constant 0 : index
    %c0_21 = arith.constant 0 : index
    %44 = vector.load %arg4[%c0_20, %c0_21] : memref<512x128xf32, #tpu.memory_space<vmem>>, vector<512x128xf32>
    %cst_22 = arith.constant dense<0.000000e+00> : vector<2x128xf32>
    %45 = tpu.matmul %42, %44, %cst_22 {dimension_numbers = #tpu.dot_dimension_numbers<[1], [0], [0], [1], [0, 0, 1, 1], [], []>} : vector<2x512xf32>, vector<512x128xf32>, vector<2x128xf32> -> vector<2x128xf32>
    %c0_23 = arith.constant 0 : index
    %c0_24 = arith.constant 0 : index
    %46 = vector.load %arg5[%c0_23, %c0_24] : memref<1x128xf32, #tpu.memory_space<vmem>>, vector<1x128xf32>
    %47 = vector.broadcast %46 : vector<1x128xf32> to vector<2x128xf32>
    %48 = arith.addf %45, %47 : vector<2x128xf32>
    %c0_25 = arith.constant 0 : index
    %c0_26 = arith.constant 0 : index
    %49 = vector.load %arg6[%c0_25, %c0_26] : memref<2x128xf32, #tpu.memory_space<vmem>>, vector<2x128xf32>
    tpu.vector_store %arg6[%c0_25, %c0_26], %48 {strides = array<i32>} : memref<2x128xf32, #tpu.memory_space<vmem>>, vector<2x128xf32>,
    return
  }
  func.func @transform_0(%arg0: i32) -> (i32, i32) {
    %c0_i32 = arith.constant 0 : i32
    %c0_i32_0 = arith.constant 0 : i32
    return %arg0, %c0_i32 : i32, i32
  }
  func.func @transform_1(%arg0: i32) -> (i32, i32) {
    %c0_i32 = arith.constant 0 : i32
    %c0_i32_0 = arith.constant 0 : i32
    %c0_i32_1 = arith.constant 0 : i32
    return %c0_i32, %c0_i32_0 : i32, i32
  }
  func.func @transform_2(%arg0: i32) -> (i32, i32) {
    %c0_i32 = arith.constant 0 : i32
    %c0_i32_0 = arith.constant 0 : i32
    %c0_i32_1 = arith.constant 0 : i32
    return %c0_i32, %c0_i32_0 : i32, i32
  }
  func.func @transform_3(%arg0: i32) -> (i32, i32) {
    %c0_i32 = arith.constant 0 : i32
    %c0_i32_0 = arith.constant 0 : i32
    %c0_i32_1 = arith.constant 0 : i32
    return %c0_i32, %c0_i32_0 : i32, i32
  }
  func.func @transform_4(%arg0: i32) -> (i32, i32) {
    %c0_i32 = arith.constant 0 : i32
    %c0_i32_0 = arith.constant 0 : i32
    %c0_i32_1 = arith.constant 0 : i32
    return %c0_i32, %c0_i32_0 : i32, i32
  }
  func.func @transform_5(%arg0: i32) -> (i32, i32) {
    %c0_i32 = arith.constant 0 : i32
    %c0_i32_0 = arith.constant 0 : i32
    return %arg0, %c0_i32 : i32, i32
  }
  func.func @transform_6(%arg0: i32) -> (i32, i32) {
    %c0_i32 = arith.constant 0 : i32
    %c0_i32_0 = arith.constant 0 : i32
    return %arg0, %c0_i32 : i32, i32
  }
}

</mosaic_0001>

<llo_original>
// kernel: tpu_custom_call.1
$region0: #{tpu_custom_call.1}
  #allocation0 [shape = 'u32[]', space=smem, size = 0x4, offset = 0x4, fixed_abs, tag = 'smem constant byte address 0x4 - core index']
  #allocation1 [shape = 'u32[72,128]{1,0:T(1,128)}', space=vmem, size = 0x9000, scoped, tag = 'internal scratch']
  %s0 = inlined_call_operand.hbm [shape: f32[2,1024], index: 0, kind: input, shape index: {}]
  %s1 = inlined_call_operand.hbm [shape: f32[4,512], index: 1, kind: input, shape index: {}]
  %s2 = inlined_call_operand.hbm [shape: f32[1,512], index: 2, kind: input, shape index: {}]
  %s3 = inlined_call_operand.hbm [shape: f32[512,128], index: 3, kind: input, shape index: {}]
  %s4 = inlined_call_operand.vmem [shape: f32[1,128], index: 4, kind: input, shape index: {}]
  %s5 = inlined_call_operand.hbm [shape: f32[2,128], index: 5, kind: output, shape index: {0}]
  %s6 = inlined_call_operand.hbm [shape: f32[2,512], index: 6, kind: output, shape index: {1}]
  %7 = xla_tuple %s5, %s6
  %s8 = sld [smem:[#allocation0]]
  $region54: #{tpu_custom_call.1} parent=0
    _
  %s10 = ssub.s32 1, %s8
  %s11 = scalar_select 0, %s10, %s8
  $region1: #{tpu_custom_call.1} parent=0
    #allocation2 [shape = 'u8[8192]{0}', space=vmem, size = 0x2000, scoped, tag = 'input window, operand 0, single buffered']
    #allocation3 [shape = 's32[1]{0}', space=sflag, size = 0x4, scoped, tag = 'scoped memory for tpu_custom_call.1']
    #allocation4 [shape = 's32[1]{0}', space=sflag, size = 0x4, scoped, tag = 'scoped memory for tpu_custom_call.1']
    #allocation5 [shape = 'u8[8192]{0}', space=vmem, size = 0x2000, scoped, tag = 'input window, operand 1, single buffered']
    #allocation6 [shape = 's32[1]{0}', space=sflag, size = 0x4, scoped, tag = 'scoped memory for tpu_custom_call.1']
    #allocation7 [shape = 'u8[2048]{0}', space=vmem, size = 0x800, scoped, tag = 'input window, operand 2, single buffered']
    #allocation8 [shape = 'u8[262144]{0}', space=vmem, size = 0x40000, scoped, tag = 'input window, operand 3, single buffered']
    #allocation9 [shape = 's32[1]{0}', space=sflag, size = 0x4, scoped, tag = 'scoped memory for tpu_custom_call.1']
    #allocation10 [shape = 'u8[1024]{0}', space=vmem, size = 0x400, scoped, tag = 'output window, operand 0, single buffered']
    #allocation11 [shape = 'u8[4096]{0}', space=vmem, size = 0x1000, scoped, tag = 'output window, operand 1, single buffered']
    #allocation12 [shape = 's32[1]{0}', space=sflag, size = 0x4, scoped, tag = 'scoped memory for tpu_custom_call.1']
    %12 = vsyncpa [#allocation3], 0
    %13 = vsyncpa [#allocation6], 0
    %14 = vsyncpa [#allocation9], 0
    %15 = vsyncpa [#allocation4], 0
    %16 = vsyncpa [#allocation12], 0
    // Predicated region
    $region2: #{tpu_custom_call.1} parent=1 // pred_check
      _
    $region3: #{tpu_custom_call.1} parent=1 // pred_check_branch
      %18 = sbr.rel (0) target = $region5
    $region4: #{tpu_custom_call.1} parent=1 // pred_region
      %20 = vsyncadd [#allocation3], 0
      %s22 = sshll.u32 %s0, 4
      %s23 = int_to_ptr.hbm [resolvable:$true] %s22
      %s24 = sshll.u32 [#allocation2], 4
      %s25 = int_to_ptr.vmem [resolvable:$true] %s24
      %27 = dma.hbm_to_vmem [thread:$0]  %s23, 256, %s25, [#allocation3]
    $region5: #{tpu_custom_call.1} parent=1 // pred_fallthru
      _
    // Predicated region
    $region6: #{tpu_custom_call.1} parent=1 // pred_check
      _
    $region7: #{tpu_custom_call.1} parent=1 // pred_check_branch
      %29 = sbr.rel (0) target = $region9
    $region8: #{tpu_custom_call.1} parent=1 // pred_region
      %31 = vsyncadd [#allocation6], 0
      %s33 = sshll.u32 %s1, 4
      %s34 = int_to_ptr.hbm [resolvable:$true] %s33
      %s35 = sshll.u32 [#allocation5], 4
      %s36 = int_to_ptr.vmem [resolvable:$true] %s35
      %38 = dma.hbm_to_vmem [thread:$0]  %s34, 256, %s36, [#allocation6]
    $region9: #{tpu_custom_call.1} parent=1 // pred_fallthru
      _
    // Predicated region
    $region10: #{tpu_custom_call.1} parent=1 // pred_check
      _
    $region11: #{tpu_custom_call.1} parent=1 // pred_check_branch
      %40 = sbr.rel (0) target = $region13
    $region12: #{tpu_custom_call.1} parent=1 // pred_region
      %42 = vsyncadd [#allocation6], 0
      %s44 = sshll.u32 %s2, 4
      %s45 = int_to_ptr.hbm [resolvable:$true] %s44
      %s46 = sshll.u32 [#allocation7], 4
      %s47 = int_to_ptr.vmem [resolvable:$true] %s46
      %49 = dma.hbm_to_vmem [thread:$0]  %s45, 64, %s47, [#allocation6]
    $region13: #{tpu_custom_call.1} parent=1 // pred_fallthru
      _
    // Predicated region
    $region14: #{tpu_custom_call.1} parent=1 // pred_check
      _
    $region15: #{tpu_custom_call.1} parent=1 // pred_check_branch
      %51 = sbr.rel (0) target = $region17
    $region16: #{tpu_custom_call.1} parent=1 // pred_region
      %53 = vsyncadd [#allocation9], 0
      %s54 = sshll.u32 %s3, 4
      %s55 = int_to_ptr.hbm [resolvable:$true] %s54
      %s56 = sshll.u32 [#allocation8], 4
      %s57 = int_to_ptr.vmem [resolvable:$true] %s56
      %62 = dma.hbm_to_vmem [thread:$0]  %s55, 8192, %s57, [#allocation9], 128, 128, 8
    $region17: #{tpu_custom_call.1} parent=1 // pred_fallthru
      _
    // Predicated region
    $region18: #{tpu_custom_call.1} parent=1 // pred_check
      _
    $region19: #{tpu_custom_call.1} parent=1 // pred_check_branch
      %64 = sbr.rel (0) target = $region21
    $region20: #{tpu_custom_call.1} parent=1 // pred_region
      _
    $region21: #{tpu_custom_call.1} parent=1 // pred_fallthru
      _
    // Predicated region
    $region22: #{tpu_custom_call.1} parent=1 // pred_check
      _
    $region23: #{tpu_custom_call.1} parent=1 // pred_check_branch
      %66 = sbr.rel (0) target = $region25
    $region24: #{tpu_custom_call.1} parent=1 // pred_region
      %68 = dma.done [#allocation3], 256
    $region25: #{tpu_custom_call.1} parent=1 // pred_fallthru
      _
    // Predicated region
    $region26: #{tpu_custom_call.1} parent=1 // pred_check
      _
    $region27: #{tpu_custom_call.1} parent=1 // pred_check_branch
      %70 = sbr.rel (0) target = $region29
    $region28: #{tpu_custom_call.1} parent=1 // pred_region
      %72 = dma.done [#allocation6], 256
    $region29: #{tpu_custom_call.1} parent=1 // pred_fallthru
      _
    // Predicated region
    $region30: #{tpu_custom_call.1} parent=1 // pred_check
      _
    $region31: #{tpu_custom_call.1} parent=1 // pred_check_branch
      %74 = sbr.rel (0) target = $region33
    $region32: #{tpu_custom_call.1} parent=1 // pred_region
      %76 = dma.done [#allocation6], 64
    $region33: #{tpu_custom_call.1} parent=1 // pred_fallthru
      _
    // Predicated region
    $region34: #{tpu_custom_call.1} parent=1 // pred_check
      _
    $region35: #{tpu_custom_call.1} parent=1 // pred_check_branch
      %78 = sbr.rel (0) target = $region37
    $region36: #{tpu_custom_call.1} parent=1 // pred_region
      %80 = dma.done [#allocation9], 8192
    $region37: #{tpu_custom_call.1} parent=1 // pred_fallthru
      _
    %v81 = vld [vmem:[#allocation7] sm:$0xf]
    %v83 = vperm.slane %v81, 0
    %v84 = vperm.slane %v81, 1
    %v85 = vperm.slane %v81, 2
    %v86 = vperm.slane %v81, 3
    %v91 = vld [vmem:[#allocation2] sm:$0xf]
    %93 = vst [vmem:[#allocation1] ss:$4 sm:$0xff] %v91
    %v94 = vld.sshfl [vmem:[#allocation1] sm:$0xff pattern:$0x73625140]
    %v95 = vld.sshfl [vmem:[#allocation1 + $0x8] sm:$0xff pattern:$0x73625140]
    %vm98 = vcmask 1041408
    %v99 = vsel %vm98, %v94, 0.0
    %v100 = vsel %vm98, %v95, 0.0
    %v101 = vadd.f32 %v99, %v100
    %102 = vadd.xlane.f32.xlu0 %v101
    %v103 = vpop.xlane.xlu0 %102
    %v104 = vmul.f32 %v103, 0.00390625
    %v105 = vld [vmem:[#allocation5] ss:$4 sm:$0xf]
    %v107 = vperm.slane %v105, 0
    %v108 = vperm.slane %v105, 1
    %v109 = vperm.slane %v105, 2
    %v110 = vperm.slane %v105, 3
    %v115 = vmul.f32 %v104, %v107
    %v116 = vmul.f32 %v104, %v108
    %v117 = vmul.f32 %v104, %v109
    %v118 = vmul.f32 %v104, %v110
    %v119 = vadd.f32 %v83, %v115
    %v120 = vadd.f32 %v84, %v116
    %v121 = vadd.f32 %v85, %v117
    %v122 = vadd.f32 %v86, %v118
    %v123 = vld [vmem:[#allocation2 + $0x4] sm:$0xf]
    %125 = vst [vmem:[#allocation1] ss:$4 sm:$0xff] %v123
    %v126 = vld.sshfl [vmem:[#allocation1] sm:$0xff pattern:$0x73625140]
    %v127 = vld.sshfl [vmem:[#allocation1 + $0x8] sm:$0xff pattern:$0x73625140]
    %v130 = vsel %vm98, %v126, 0.0
    %v131 = vsel %vm98, %v127, 0.0
    %v132 = vadd.f32 %v130, %v131
    %133 = vadd.xlane.f32.xlu0 %v132
    %v134 = vpop.xlane.xlu0 %133
    %v135 = vmul.f32 %v134, 0.00390625
    %s136 = scalar_lea.vmem [#allocation5], 1
    %v137 = vld [vmem:[%s136] ss:$4 sm:$0xf]
    %v139 = vperm.slane %v137, 0
    %v140 = vperm.slane %v137, 1
    %v141 = vperm.slane %v137, 2
    %v142 = vperm.slane %v137, 3
    %v147 = vmul.f32 %v135, %v139
    %v148 = vmul.f32 %v135, %v140
    %v149 = vmul.f32 %v135, %v141
    %v150 = vmul.f32 %v135, %v142
    %v151 = vadd.f32 %v119, %v147
    %v152 = vadd.f32 %v120, %v148
    %v153 = vadd.f32 %v121, %v149
    %v154 = vadd.f32 %v122, %v150
    %v155 = vld [vmem:[#allocation2 + $0x8] sm:$0xf]
    %157 = vst [vmem:[#allocation1] ss:$4 sm:$0xff] %v155
    %v158 = vld.sshfl [vmem:[#allocation1] sm:$0xff pattern:$0x73625140]
    %v159 = vld.sshfl [vmem:[#allocation1 + $0x8] sm:$0xff pattern:$0x73625140]
    %v162 = vsel %vm98, %v158, 0.0
    %v163 = vsel %vm98, %v159, 0.0
    %v164 = vadd.f32 %v162, %v163
    %165 = vadd.xlane.f32.xlu0 %v164
    %v166 = vpop.xlane.xlu0 %165
    %v167 = vmul.f32 %v166, 0.00390625
    %s168 = scalar_lea.vmem [#allocation5], 2
    %v169 = vld [vmem:[%s168] ss:$4 sm:$0xf]
    %v171 = vperm.slane %v169, 0
    %v172 = vperm.slane %v169, 1
    %v173 = vperm.slane %v169, 2
    %v174 = vperm.slane %v169, 3
    %v179 = vmul.f32 %v167, %v171
    %v180 = vmul.f32 %v167, %v172
    %v181 = vmul.f32 %v167, %v173
    %v182 = vmul.f32 %v167, %v174
    %v183 = vadd.f32 %v151, %v179
    %v184 = vadd.f32 %v152, %v180
    %v185 = vadd.f32 %v153, %v181
    %v186 = vadd.f32 %v154, %v182
    %v187 = vld [vmem:[#allocation2 + $0xc] sm:$0xf]
    %189 = vst [vmem:[#allocation1] ss:$4 sm:$0xff] %v187
    %v190 = vld.sshfl [vmem:[#allocation1] sm:$0xff pattern:$0x73625140]
    %v191 = vld.sshfl [vmem:[#allocation1 + $0x8] sm:$0xff pattern:$0x73625140]
    %v194 = vsel %vm98, %v190, 0.0
    %v195 = vsel %vm98, %v191, 0.0
    %v196 = vadd.f32 %v194, %v195
    %197 = vadd.xlane.f32.xlu0 %v196
    %v198 = vpop.xlane.xlu0 %197
    %v199 = vmul.f32 %v198, 0.00390625
    %s200 = scalar_lea.vmem [#allocation5], 3
    %v201 = vld [vmem:[%s200] ss:$4 sm:$0xf]
    %v203 = vperm.slane %v201, 0
    %v204 = vperm.slane %v201, 1
    %v205 = vperm.slane %v201, 2
    %v206 = vperm.slane %v201, 3
    %v211 = vmul.f32 %v199, %v203
    %v212 = vmul.f32 %v199, %v204
    %v213 = vmul.f32 %v199, %v205
    %v214 = vmul.f32 %v199, %v206
    %v215 = vadd.f32 %v183, %v211
    %v216 = vadd.f32 %v184, %v212
    %v217 = vadd.f32 %v185, %v213
    %v218 = vadd.f32 %v186, %v214
    %v223 = vrot.slane %v216, 6
    %v224 = vrot.slane %v217, 4
    %v225 = vrot.slane %v218, 2
    %v226 = vsel %vm98, %v215, %v223
    %vm227 = vcmask 1045508
    %v228 = vsel %vm227, %v224, %v225
    %vm229 = vcmask 1043456
    %v230 = vsel %vm229, %v226, %v228
    %232 = vst [vmem:[#allocation11] sm:$0xff] %v230
    %v233 = vld [vmem:[#allocation8] sm:$0xff]
    %v234 = vld [vmem:[#allocation8 + $0x8] sm:$0xff]
    %v235 = vld [vmem:[#allocation8 + $0x10] sm:$0xff]
    %v236 = vld [vmem:[#allocation8 + $0x18] sm:$0xff]
    %v237 = vld [vmem:[#allocation8 + $0x20] sm:$0xff]
    %v238 = vld [vmem:[#allocation8 + $0x28] sm:$0xff]
    %v239 = vld [vmem:[#allocation8 + $0x30] sm:$0xff]
    %v240 = vld [vmem:[#allocation8 + $0x38] sm:$0xff]
    %v241 = vld [vmem:[#allocation8 + $0x40] sm:$0xff]
    %v242 = vld [vmem:[#allocation8 + $0x48] sm:$0xff]
    %v243 = vld [vmem:[#allocation8 + $0x50] sm:$0xff]
    %v244 = vld [vmem:[#allocation8 + $0x58] sm:$0xff]
    %v245 = vld [vmem:[#allocation8 + $0x60] sm:$0xff]
    %v246 = vld [vmem:[#allocation8 + $0x68] sm:$0xff]
    %v247 = vld [vmem:[#allocation8 + $0x70] sm:$0xff]
    %v248 = vld [vmem:[#allocation8 + $0x78] sm:$0xff]
    %v249 = vld [vmem:[#allocation8 + $0x80] sm:$0xff]
    %v250 = vld [vmem:[#allocation8 + $0x88] sm:$0xff]
    %v251 = vld [vmem:[#allocation8 + $0x90] sm:$0xff]
    %v252 = vld [vmem:[#allocation8 + $0x98] sm:$0xff]
    %v253 = vld [vmem:[#allocation8 + $0xa0] sm:$0xff]
    %v254 = vld [vmem:[#allocation8 + $0xa8] sm:$0xff]
    %v255 = vld [vmem:[#allocation8 + $0xb0] sm:$0xff]
    %v256 = vld [vmem:[#allocation8 + $0xb8] sm:$0xff]
    %v257 = vld [vmem:[#allocation8 + $0xc0] sm:$0xff]
    %v258 = vld [vmem:[#allocation8 + $0xc8] sm:$0xff]
    %v259 = vld [vmem:[#allocation8 + $0xd0] sm:$0xff]
    %v260 = vld [vmem:[#allocation8 + $0xd8] sm:$0xff]
    %v261 = vld [vmem:[#allocation8 + $0xe0] sm:$0xff]
    %v262 = vld [vmem:[#allocation8 + $0xe8] sm:$0xff]
    %v263 = vld [vmem:[#allocation8 + $0xf0] sm:$0xff]
    %v264 = vld [vmem:[#allocation8 + $0xf8] sm:$0xff]
    %v265 = vld [vmem:[#allocation8 + $0x100] sm:$0xff]
    %v266 = vld [vmem:[#allocation8 + $0x108] sm:$0xff]
    %v267 = vld [vmem:[#allocation8 + $0x110] sm:$0xff]
    %v268 = vld [vmem:[#allocation8 + $0x118] sm:$0xff]
    %v269 = vld [vmem:[#allocation8 + $0x120] sm:$0xff]
    %v270 = vld [vmem:[#allocation8 + $0x128] sm:$0xff]
    %v271 = vld [vmem:[#allocation8 + $0x130] sm:$0xff]
    %v272 = vld [vmem:[#allocation8 + $0x138] sm:$0xff]
    %v273 = vld [vmem:[#allocation8 + $0x140] sm:$0xff]
    %v274 = vld [vmem:[#allocation8 + $0x148] sm:$0xff]
    %v275 = vld [vmem:[#allocation8 + $0x150] sm:$0xff]
    %v276 = vld [vmem:[#allocation8 + $0x158] sm:$0xff]
    %v277 = vld [vmem:[#allocation8 + $0x160] sm:$0xff]
    %v278 = vld [vmem:[#allocation8 + $0x168] sm:$0xff]
    %v279 = vld [vmem:[#allocation8 + $0x170] sm:$0xff]
    %v280 = vld [vmem:[#allocation8 + $0x178] sm:$0xff]
    %v281 = vld [vmem:[#allocation8 + $0x180] sm:$0xff]
    %v282 = vld [vmem:[#allocation8 + $0x188] sm:$0xff]
    %v283 = vld [vmem:[#allocation8 + $0x190] sm:$0xff]
    %v284 = vld [vmem:[#allocation8 + $0x198] sm:$0xff]
    %v285 = vld [vmem:[#allocation8 + $0x1a0] sm:$0xff]
    %v286 = vld [vmem:[#allocation8 + $0x1a8] sm:$0xff]
    %v287 = vld [vmem:[#allocation8 + $0x1b0] sm:$0xff]
    %v288 = vld [vmem:[#allocation8 + $0x1b8] sm:$0xff]
    %v289 = vld [vmem:[#allocation8 + $0x1c0] sm:$0xff]
    %v290 = vld [vmem:[#allocation8 + $0x1c8] sm:$0xff]
    %v291 = vld [vmem:[#allocation8 + $0x1d0] sm:$0xff]
    %v292 = vld [vmem:[#allocation8 + $0x1d8] sm:$0xff]
    %v293 = vld [vmem:[#allocation8 + $0x1e0] sm:$0xff]
    %v294 = vld [vmem:[#allocation8 + $0x1e8] sm:$0xff]
    %v295 = vld [vmem:[#allocation8 + $0x1f0] sm:$0xff]
    %v296 = vld [vmem:[#allocation8 + $0x1f8] sm:$0xff]
    %v297 = vld [vmem:[%s4] sm:$0x1]
    %v299 = vperm.slane %v297, 0
    %301 = vmatpush.msra.mxu0 %v248
    %302 = vmatpush.msra.mxu0 %v247
    %303 = vmatpush.msra.mxu0 %v246
    %304 = vmatpush.msra.mxu0 %v245
    %305 = vmatpush.msra.mxu0 %v244
    %306 = vmatpush.msra.mxu0 %v243
    %307 = vmatpush.msra.mxu0 %v242
    %308 = vmatpush.msra.mxu0 %v241
    %309 = vmatpush.msra.mxu0 %v240
    %310 = vmatpush.msra.mxu0 %v239
    %311 = vmatpush.msra.mxu0 %v238
    %312 = vmatpush.msra.mxu0 %v237
    %313 = vmatpush.msra.mxu0 %v236
    %314 = vmatpush.msra.mxu0 %v235
    %315 = vmatpush.msra.mxu0 %v234
    %316 = vmatpush.msra.mxu0 %v233
    %317 = vmatmul.f32.gmra.mxu0 %v215
    %v318 = vpop.f32.mrf.mxu0
    %v319 = vadd.f32 %v299, %v318
    %320 = vdwg.mxu0
    %321 = vmatpush.msra.mxu0 %v264
    %322 = vmatpush.msra.mxu0 %v263
    %323 = vmatpush.msra.mxu0 %v262
    %324 = vmatpush.msra.mxu0 %v261
    %325 = vmatpush.msra.mxu0 %v260
    %326 = vmatpush.msra.mxu0 %v259
    %327 = vmatpush.msra.mxu0 %v258
    %328 = vmatpush.msra.mxu0 %v257
    %329 = vmatpush.msra.mxu0 %v256
    %330 = vmatpush.msra.mxu0 %v255
    %331 = vmatpush.msra.mxu0 %v254
    %332 = vmatpush.msra.mxu0 %v253
    %333 = vmatpush.msra.mxu0 %v252
    %334 = vmatpush.msra.mxu0 %v251
    %335 = vmatpush.msra.mxu0 %v250
    %336 = vmatpush.msra.mxu0 %v249
    %337 = vmatmul.f32.gmra.mxu0 %v216
    %v338 = vpop.f32.mrf.mxu0
    %v339 = vadd.f32 %v319, %v338
    %340 = vdwg.mxu0
    %341 = vmatpush.msra.mxu0 %v280
    %342 = vmatpush.msra.mxu0 %v279
    %343 = vmatpush.msra.mxu0 %v278
    %344 = vmatpush.msra.mxu0 %v277
    %345 = vmatpush.msra.mxu0 %v276
    %346 = vmatpush.msra.mxu0 %v275
    %347 = vmatpush.msra.mxu0 %v274
    %348 = vmatpush.msra.mxu0 %v273
    %349 = vmatpush.msra.mxu0 %v272
    %350 = vmatpush.msra.mxu0 %v271
    %351 = vmatpush.msra.mxu0 %v270
    %352 = vmatpush.msra.mxu0 %v269
    %353 = vmatpush.msra.mxu0 %v268
    %354 = vmatpush.msra.mxu0 %v267
    %355 = vmatpush.msra.mxu0 %v266
    %356 = vmatpush.msra.mxu0 %v265
    %357 = vmatmul.f32.gmra.mxu0 %v217
    %v358 = vpop.f32.mrf.mxu0
    %v359 = vadd.f32 %v339, %v358
    %360 = vdwg.mxu0
    %361 = vmatpush.msra.mxu0 %v296
    %362 = vmatpush.msra.mxu0 %v295
    %363 = vmatpush.msra.mxu0 %v294
    %364 = vmatpush.msra.mxu0 %v293
    %365 = vmatpush.msra.mxu0 %v292
    %366 = vmatpush.msra.mxu0 %v291
    %367 = vmatpush.msra.mxu0 %v290
    %368 = vmatpush.msra.mxu0 %v289
    %369 = vmatpush.msra.mxu0 %v288
    %370 = vmatpush.msra.mxu0 %v287
    %371 = vmatpush.msra.mxu0 %v286
    %372 = vmatpush.msra.mxu0 %v285
    %373 = vmatpush.msra.mxu0 %v284
    %374 = vmatpush.msra.mxu0 %v283
    %375 = vmatpush.msra.mxu0 %v282
    %376 = vmatpush.msra.mxu0 %v281
    %377 = vmatmul.f32.gmra.mxu0 %v218
    %v378 = vpop.f32.mrf.mxu0
    %v379 = vadd.f32 %v359, %v378
    %380 = vdwg.mxu0
    %381 = vst [vmem:[#allocation10] sm:$0x3] %v379
    // Predicated region
    $region38: #{tpu_custom_call.1} parent=1 // pred_check
      _
    $region39: #{tpu_custom_call.1} parent=1 // pred_check_branch
      %383 = sbr.rel (0) target = $region41
    $region40: #{tpu_custom_call.1} parent=1 // pred_region
      %385 = vsyncadd [#allocation4], 0
      %s387 = sshll.u32 [#allocation10], 4
      %s388 = int_to_ptr.vmem [resolvable:$true] %s387
      %s389 = sshll.u32 %s5, 4
      %s390 = int_to_ptr.hbm [resolvable:$true] %s389
      %392 = dma.vmem_to_hbm [thread:$0]  %s388, 32, %s390, [#allocation4]
    $region41: #{tpu_custom_call.1} parent=1 // pred_fallthru
      _
    // Predicated region
    $region42: #{tpu_custom_call.1} parent=1 // pred_check
      _
    $region43: #{tpu_custom_call.1} parent=1 // pred_check_branch
      %394 = sbr.rel (0) target = $region45
    $region44: #{tpu_custom_call.1} parent=1 // pred_region
      %396 = vsyncadd [#allocation12], 0
      %s398 = sshll.u32 [#allocation11], 4
      %s399 = int_to_ptr.vmem [resolvable:$true] %s398
      %s400 = sshll.u32 %s6, 4
      %s401 = int_to_ptr.hbm [resolvable:$true] %s400
      %403 = dma.vmem_to_hbm [thread:$0]  %s399, 128, %s401, [#allocation12]
    $region45: #{tpu_custom_call.1} parent=1 // pred_fallthru
      _
    // Predicated region
    $region46: #{tpu_custom_call.1} parent=1 // pred_check
      _
    $region47: #{tpu_custom_call.1} parent=1 // pred_check_branch
      %405 = sbr.rel (0) target = $region49
    $region48: #{tpu_custom_call.1} parent=1 // pred_region
      %407 = dma.done [#allocation4], 32
    $region49: #{tpu_custom_call.1} parent=1 // pred_fallthru
      _
    // Predicated region
    $region50: #{tpu_custom_call.1} parent=1 // pred_check
      _
    $region51: #{tpu_custom_call.1} parent=1 // pred_check_branch
      %409 = sbr.rel (0) target = $region53
    $region52: #{tpu_custom_call.1} parent=1 // pred_region
      %411 = dma.done [#allocation12], 128
    $region53: #{tpu_custom_call.1} parent=1 // pred_fallthru
      _
    %412 = vsyncpa [#allocation3], 1
    %413 = vsyncpa [#allocation6], 1
    %414 = vsyncpa [#allocation9], 1
    %415 = vsyncpa [#allocation4], 1
    %416 = vsyncpa [#allocation12], 1

</llo_original>
